<compile_context>
chip_gen: v7x
topology: tpu7x:2x2x1
jax: 0.10.0
libtpu: 0.0.40
codegen_flags: <defaults>
</compile_context>

<pallas_src>
import jax
import jax.numpy as jnp
from jax import lax
from jax.experimental import pallas as pl
from jax.experimental.pallas import tpu as pltpu

BN_EPS = 1e-5
_VMEM_LIMIT = 32 * 1024 * 1024  # safe on v5e/v6e (128 MiB phys) and v7x (64 MiB)


# ---------------------------------------------------------------------------
# tile selection
# ---------------------------------------------------------------------------
def _choose_tile(hw, cin, cout, itemsize, budget_bytes=12 << 20, cap=32768):
    """Pick a lane-dense pixel tile and the padded HW it implies.

    Budget covers double-buffered x and out blocks plus the f32 matmul temp,
    so it stays well under the scoped-VMEM limit on all generations
    (including v7x's smaller 64 MiB physical VMEM)."""
    per_pix = 2 * (cin + cout) * itemsize + 4 * cout
    max_thw = max(128, (budget_bytes // per_pix) // 128 * 128)
    thw = int(min(cap, max_thw))
    if hw <= thw:
        # One tile covers all pixels; round up to a multiple of 128 when we
        # can so stores stay unmasked (full-extent blocks are always legal).
        thw = ((hw + 127) // 128) * 128 if hw >= 128 else hw
    hw_pad = ((hw + thw - 1) // thw) * thw
    return thw, hw_pad


# ---------------------------------------------------------------------------
# kernels
# ---------------------------------------------------------------------------
def _fused_kernel(x_ref, w_ref, g_ref, b_ref, o_ref):
    """Single-pass path: x resident in VMEM, stats + fold + apply in one go.

    x_ref: (N, Cin, HW)  w_ref: (Cout, Cin) f32  g_ref/b_ref: (Cout, 1) f32
    o_ref: (N, Cout, HW)
    """
    n, cin, hw = x_ref.shape
    s = jnp.zeros((cin, 1), jnp.float32)
    gram = jnp.zeros((cin, cin), jnp.float32)
    for i in range(n):  # static unroll (fused path only for small N)
        xi = x_ref[i]                                           # (Cin, HW)
        s = s + jnp.sum(xi.astype(jnp.float32), axis=1, keepdims=True)
        gram = gram + lax.dot_general(                          # x_i @ x_i^T
            xi, xi, (((1,), (1,)), ((), ())),
            preferred_element_type=jnp.float32)

    w = w_ref[...]                                              # (Cout, Cin)
    p = float(n * hw)
    sum_y = jnp.dot(w, s, preferred_element_type=jnp.float32)   # (Cout, 1)
    sq_y = jnp.sum(jnp.dot(w, gram, preferred_element_type=jnp.float32) * w,
                   axis=1, keepdims=True)                       # diag(w G w^T)
    mean = sum_y / p
    var = jnp.maximum(sq_y / p - mean * mean, 0.0)
    scale = lax.rsqrt(var + BN_EPS) * g_ref[...]
    bias = b_ref[...] - mean * scale
    w_fold = (w * scale).astype(x_ref.dtype)

    for i in range(n):
        y = jnp.dot(w_fold, x_ref[i], preferred_element_type=jnp.float32) + bias
        o_ref[i] = y.astype(o_ref.dtype)


def _stats_kernel(x_ref, s_ref, g_ref):
    """Pass 1: per-batch partial sum(x) and Gram(x), accumulated over the
    (innermost, "arbitrary") pixel-tile axis.  No Cout dependence, no
    (Cout, THW) intermediate."""
    @pl.when(pl.program_id(1) == 0)
    def _():
        s_ref[...] = jnp.zeros_like(s_ref)
        g_ref[...] = jnp.zeros_like(g_ref)

    x = x_ref[...]                                              # (Cin, THW)
    s_ref[...] += jnp.sum(x.astype(jnp.float32), axis=1, keepdims=True)
    g_ref[...] += lax.dot_general(x, x, (((1,), (1,)), ((), ())),
                                  preferred_element_type=jnp.float32)


def _apply_kernel(x_ref, w_ref, b_ref, o_ref):
    """Pass 2: out = w' @ x + b' (folded BN).  Lane-dense (tCout, THW) store."""
    y = jnp.dot(w_ref[...], x_ref[...], preferred_element_type=jnp.float32)
    o_ref[...] = (y + b_ref[...]).astype(o_ref.dtype)


# ---------------------------------------------------------------------------
# wrapper
# ---------------------------------------------------------------------------
def mapping_forward(x_nchw, conv_w, bn_gamma, bn_beta, *, force_two_pass=False):
    """x_nchw: (N, Cin, H, W); conv_w: (Cout, Cin, 1, 1); gamma/beta: (Cout,)."""
    N, Cin, H, W = x_nchw.shape
    Cout = conv_w.shape[0]
    HW = H * W
    P = N * HW
    itemsize = jnp.dtype(x_nchw.dtype).itemsize

    # Free reshapes only.
    x_mat = x_nchw.reshape(N, Cin, HW)
    w32 = conv_w.reshape(Cout, Cin).astype(jnp.float32)
    gamma = bn_gamma.reshape(Cout, 1).astype(jnp.float32)
    beta = bn_beta.reshape(Cout, 1).astype(jnp.float32)

    # ---- fused single-pass path (x read from HBM once) ---------------------
    fused_bytes = (N * HW * (Cin + Cout) * itemsize
                   + Cout * HW * 4 + Cout * Cin * 4)
    if not force_two_pass and fused_bytes <= (8 << 20) and N <= 16:
        vmem = pl.BlockSpec(memory_space=pltpu.MemorySpace.VMEM)
        out = pl.pallas_call(
            _fused_kernel,
            out_shape=jax.ShapeDtypeStruct((N, Cout, HW), x_nchw.dtype),
            in_specs=[vmem, vmem, vmem, vmem],
            out_specs=vmem,
            compiler_params=pltpu.CompilerParams(vmem_limit_bytes=_VMEM_LIMIT),
        )(x_mat, w32, gamma, beta)
        return out.reshape(N, Cout, H, W)

    # ---- two-pass path ------------------------------------------------------
    thw, HW_pad = _choose_tile(HW, Cin, Cout, itemsize)
    if HW_pad != HW:
        # Zero pad: contributes nothing to sum(x) / Gram(x); sliced off at end.
        x_mat = jnp.pad(x_mat, ((0, 0), (0, 0), (0, HW_pad - HW)))
    n_t = HW_pad // thw
    P_pad = N * HW_pad

    # pass 1: per-batch partial statistics (batch axis parallel for v7x's 2 TCs)
    stats_cost = pl.CostEstimate(
        flops=P_pad * Cin * (2 * Cin + 1),
        transcendentals=0,
        bytes_accessed=int(P_pad * Cin * itemsize + N * Cin * (Cin + 1) * 4),
    )
    s_part, g_part = pl.pallas_call(
        _stats_kernel,
        out_shape=(jax.ShapeDtypeStruct((N, Cin, 1), jnp.float32),
                   jax.ShapeDtypeStruct((N, Cin, Cin), jnp.float32)),
        grid=(N, n_t),
        in_specs=[pl.BlockSpec((None, Cin, thw), lambda n, t: (n, 0, t))],
        out_specs=(pl.BlockSpec((None, Cin, 1), lambda n, t: (n, 0, 0)),
                   pl.BlockSpec((None, Cin, Cin), lambda n, t: (n, 0, 0))),
        compiler_params=pltpu.CompilerParams(
            dimension_semantics=("parallel", "arbitrary"),
            vmem_limit_bytes=_VMEM_LIMIT),
        cost_estimate=stats_cost,
    )(x_mat)

    # host glue: reduce partials, fold BN affine into the conv weight/bias.
    s = jnp.sum(s_part, axis=0)                     # (Cin, 1)
    gram = jnp.sum(g_part, axis=0)                  # (Cin, Cin)
    sum_y = w32 @ s                                 # (Cout, 1)
    sq_y = jnp.sum((w32 @ gram) * w32, axis=1, keepdims=True)
    mean = sum_y / P                                # padded pixels are zero
    var = jnp.maximum(sq_y / P - mean * mean, 0.0)  # biased (training-mode BN)
    scale = lax.rsqrt(var + BN_EPS) * gamma
    bias = beta - mean * scale                      # (Cout, 1) f32
    w_fold = w32 * scale
    if x_nchw.dtype != jnp.float32:
        w_fold = w_fold.astype(x_nchw.dtype)        # MXU-native operand dtype

    # pass 2: out = w' @ x + b'
    tco = 256 if (Cout > 512 and Cout % 256 == 0) else Cout
    n_co = Cout // tco
    apply_cost = pl.CostEstimate(
        flops=P_pad * Cout * (2 * Cin + 1),
        transcendentals=0,
        bytes_accessed=int(P_pad * (Cin + Cout) * itemsize
                           + Cout * (Cin + 1) * 4),
    )
    out = pl.pallas_call(
        _apply_kernel,
        out_shape=jax.ShapeDtypeStruct((N, Cout, HW_pad), x_nchw.dtype),
        grid=(N, n_t, n_co),
        in_specs=[
            # x block index unchanged across the co axis -> not re-DMA'd.
            pl.BlockSpec((None, Cin, thw), lambda n, t, co: (n, 0, t)),
            pl.BlockSpec((tco, Cin), lambda n, t, co: (co, 0)),
            pl.BlockSpec((tco, 1), lambda n, t, co: (co, 0)),
        ],
        out_specs=pl.BlockSpec((None, tco, thw), lambda n, t, co: (n, co, t)),
        compiler_params=pltpu.CompilerParams(
            dimension_semantics=("parallel", "parallel", "arbitrary"),
            vmem_limit_bytes=_VMEM_LIMIT),
        cost_estimate=apply_cost,
    )(x_mat, w_fold, bias)

    if HW_pad != HW:
        out = out[:, :, :HW]
    return out.reshape(N, Cout, H, W)


# ---------------------------------------------------------------------------
# pure-JAX reference (PyTorch training-mode BN semantics)
# ---------------------------------------------------------------------------
def _reference(x_nchw, conv_w, bn_gamma, bn_beta):
    N, Cin, H, W = x_nchw.shape
    Cout = conv_w.shape[0]
    y = jnp.einsum("nchw,oc->nohw", x_nchw.astype(jnp.float32),
                   conv_w.reshape(Cout, Cin).astype(jnp.float32))
    mean = jnp.mean(y, axis=(0, 2, 3), keepdims=True)
    var = jnp.mean((y - mean) ** 2, axis=(0, 2, 3), keepdims=True)
    g = bn_gamma.reshape(1, Cout, 1, 1)
    b = bn_beta.reshape(1, Cout, 1, 1)
    return ((y - mean) / jnp.sqrt(var + BN_EPS)) * g + b


if __name__ == "__main__":
    key = jax.random.PRNGKey(0)
    kx, kw, kg, kb = jax.random.split(key, 4)

    N, Cin, H, W = 2, 4, 16, 16
    Cout = 8

    x = jax.random.normal(kx, (N, Cin, H, W), dtype=jnp.float32)
    # Conv2d(in=4, out=8, k=1, bias=False) weight: (8, 4, 1, 1)
    conv_w = jax.random.normal(kw, (Cout, Cin, 1, 1), dtype=jnp.float32) * 0.1
    # BatchNorm2d(8) affine params (non-trivial to exercise the fold)
    bn_gamma = 1.0 + 0.1 * jax.random.normal(kg, (Cout,), dtype=jnp.float32)
    bn_beta = 0.1 * jax.random.normal(kb, (Cout,), dtype=jnp.float32)

    # TODO(synk): running_mean/running_var buffers are not updated (forward
    # activation math only), matching training-mode batch normalization.
    ref = _reference(x, conv_w, bn_gamma, bn_beta)

    out_fused = jax.block_until_ready(
        mapping_forward(x, conv_w, bn_gamma, bn_beta))
    out_tiled = jax.block_until_ready(
        mapping_forward(x, conv_w, bn_gamma, bn_beta, force_two_pass=True))

    assert out_fused.shape == (N, Cout, H, W)
    assert out_tiled.shape == (N, Cout, H, W)
    assert jnp.allclose(out_fused, ref, atol=1e-4, rtol=1e-4), "fused mismatch"
    assert jnp.allclose(out_tiled, ref, atol=1e-4, rtol=1e-4), "two-pass mismatch"

    print("KERNEL_OK")
</pallas_src>

<mosaic_0001>
module attributes {stable_mosaic.version = 11 : i64} {
  func.func @_fused_kernel(%arg0: memref<2x4x256xf32, #tpu.memory_space<vmem>>, %arg1: memref<8x4xf32, #tpu.memory_space<vmem>>, %arg2: memref<8x1xf32, #tpu.memory_space<vmem>>, %arg3: memref<8x1xf32, #tpu.memory_space<vmem>>, %arg4: memref<2x8x256xf32, #tpu.memory_space<vmem>>) attributes {dimension_semantics = [], scalar_prefetch = 0 : i64, scratch_operands = 0 : i64, tpu.core_type = #tpu.core_type<tc>} {
    %cst = arith.constant 0.000000e+00 : f32
    %0 = vector.broadcast %cst : f32 to vector<4x1xf32>
    %cst_0 = arith.constant 0.000000e+00 : f32
    %1 = vector.broadcast %cst_0 : f32 to vector<4x4xf32>
    %c0 = arith.constant 0 : index
    %c0_1 = arith.constant 0 : index
    %c0_2 = arith.constant 0 : index
    %2 = vector.load %arg0[%c0, %c0_1, %c0_2] : memref<2x4x256xf32, #tpu.memory_space<vmem>>, vector<1x4x256xf32>
    %3 = vector.shape_cast %2 : vector<1x4x256xf32> to vector<4x256xf32>
    %cst_3 = arith.constant dense<0.000000e+00> : vector<4xf32>
    %4 = vector.multi_reduction <add>, %3, %cst_3 [1] : vector<4x256xf32> to vector<4xf32>
    %5 = vector.shape_cast %4 : vector<4xf32> to vector<4x1xf32>
    %6 = arith.addf %0, %5 : vector<4x1xf32>
    %cst_4 = arith.constant dense<0.000000e+00> : vector<4x4xf32>
    %7 = tpu.matmul %3, %3, %cst_4 {dimension_numbers = #tpu.dot_dimension_numbers<[1], [1], [0], [0], [0, 0, 1, 0], [], []>} : vector<4x256xf32>, vector<4x256xf32>, vector<4x4xf32> -> vector<4x4xf32>
    %8 = arith.addf %1, %7 : vector<4x4xf32>
    %c1 = arith.constant 1 : index
    %c0_5 = arith.constant 0 : index
    %c0_6 = arith.constant 0 : index
    %9 = vector.load %arg0[%c1, %c0_5, %c0_6] : memref<2x4x256xf32, #tpu.memory_space<vmem>>, vector<1x4x256xf32>
    %10 = vector.shape_cast %9 : vector<1x4x256xf32> to vector<4x256xf32>
    %cst_7 = arith.constant dense<0.000000e+00> : vector<4xf32>
    %11 = vector.multi_reduction <add>, %10, %cst_7 [1] : vector<4x256xf32> to vector<4xf32>
    %12 = vector.shape_cast %11 : vector<4xf32> to vector<4x1xf32>
    %13 = arith.addf %6, %12 : vector<4x1xf32>
    %cst_8 = arith.constant dense<0.000000e+00> : vector<4x4xf32>
    %14 = tpu.matmul %10, %10, %cst_8 {dimension_numbers = #tpu.dot_dimension_numbers<[1], [1], [0], [0], [0, 0, 1, 0], [], []>} : vector<4x256xf32>, vector<4x256xf32>, vector<4x4xf32> -> vector<4x4xf32>
    %15 = arith.addf %8, %14 : vector<4x4xf32>
    %c0_9 = arith.constant 0 : index
    %c0_10 = arith.constant 0 : index
    %16 = vector.load %arg1[%c0_9, %c0_10] : memref<8x4xf32, #tpu.memory_space<vmem>>, vector<8x4xf32>
    %cst_11 = arith.constant dense<0.000000e+00> : vector<8x1xf32>
    %17 = tpu.matmul %16, %13, %cst_11 {dimension_numbers = #tpu.dot_dimension_numbers<[1], [0], [0], [1], [0, 0, 1, 1], [], []>} : vector<8x4xf32>, vector<4x1xf32>, vector<8x1xf32> -> vector<8x1xf32>
    %cst_12 = arith.constant dense<0.000000e+00> : vector<8x4xf32>
    %18 = tpu.matmul %16, %15, %cst_12 {dimension_numbers = #tpu.dot_dimension_numbers<[1], [0], [0], [1], [0, 0, 1, 1], [], []>} : vector<8x4xf32>, vector<4x4xf32>, vector<8x4xf32> -> vector<8x4xf32>
    %19 = arith.mulf %18, %16 : vector<8x4xf32>
    %cst_13 = arith.constant dense<0.000000e+00> : vector<8xf32>
    %20 = vector.multi_reduction <add>, %19, %cst_13 [1] : vector<8x4xf32> to vector<8xf32>
    %21 = vector.shape_cast %20 : vector<8xf32> to vector<8x1xf32>
    %cst_14 = arith.constant 5.120000e+02 : f32
    %22 = vector.broadcast %cst_14 : f32 to vector<8x1xf32>
    %23 = arith.divf %17, %22 : vector<8x1xf32>
    %cst_15 = arith.constant 5.120000e+02 : f32
    %24 = vector.broadcast %cst_15 : f32 to vector<8x1xf32>
    %25 = arith.divf %21, %24 : vector<8x1xf32>
    %26 = arith.mulf %23, %23 : vector<8x1xf32>
    %27 = arith.subf %25, %26 : vector<8x1xf32>
    %cst_16 = arith.constant 0.000000e+00 : f32
    %28 = vector.broadcast %cst_16 : f32 to vector<8x1xf32>
    %29 = arith.maximumf %27, %28 : vector<8x1xf32>
    %cst_17 = arith.constant 9.99999974E-6 : f32
    %30 = vector.broadcast %cst_17 : f32 to vector<8x1xf32>
    %31 = arith.addf %29, %30 : vector<8x1xf32>
    %32 = math.rsqrt %31 : vector<8x1xf32>
    %c0_18 = arith.constant 0 : index
    %c0_19 = arith.constant 0 : index
    %33 = vector.load %arg2[%c0_18, %c0_19] : memref<8x1xf32, #tpu.memory_space<vmem>>, vector<8x1xf32>
    %34 = arith.mulf %32, %33 : vector<8x1xf32>
    %c0_20 = arith.constant 0 : index
    %c0_21 = arith.constant 0 : index
    %35 = vector.load %arg3[%c0_20, %c0_21] : memref<8x1xf32, #tpu.memory_space<vmem>>, vector<8x1xf32>
    %36 = arith.mulf %23, %34 : vector<8x1xf32>
    %37 = arith.subf %35, %36 : vector<8x1xf32>
    %38 = vector.broadcast %34 : vector<8x1xf32> to vector<8x4xf32>
    %39 = arith.mulf %16, %38 : vector<8x4xf32>
    %c0_22 = arith.constant 0 : index
    %c0_23 = arith.constant 0 : index
    %c0_24 = arith.constant 0 : index
    %40 = vector.load %arg0[%c0_22, %c0_23, %c0_24] : memref<2x4x256xf32, #tpu.memory_space<vmem>>, vector<1x4x256xf32>
    %41 = vector.shape_cast %40 : vector<1x4x256xf32> to vector<4x256xf32>
    %cst_25 = arith.constant dense<0.000000e+00> : vector<8x256xf32>
    %42 = tpu.matmul %39, %41, %cst_25 {dimension_numbers = #tpu.dot_dimension_numbers<[1], [0], [0], [1], [0, 0, 1, 1], [], []>} : vector<8x4xf32>, vector<4x256xf32>, vector<8x256xf32> -> vector<8x256xf32>
    %43 = vector.broadcast %37 : vector<8x1xf32> to vector<8x256xf32>
    %44 = arith.addf %42, %43 : vector<8x256xf32>
    %c0_26 = arith.constant 0 : index
    %c0_27 = arith.constant 0 : index
    %c0_28 = arith.constant 0 : index
    %45 = vector.load %arg4[%c0_26, %c0_27, %c0_28] : memref<2x8x256xf32, #tpu.memory_space<vmem>>, vector<1x8x256xf32>
    %46 = vector.shape_cast %45 : vector<1x8x256xf32> to vector<8x256xf32>
    %47 = vector.shape_cast %44 : vector<8x256xf32> to vector<1x8x256xf32>
    tpu.vector_store %arg4[%c0_26, %c0_27, %c0_28], %47 {strides = array<i32>} : memref<2x8x256xf32, #tpu.memory_space<vmem>>, vector<1x8x256xf32>,
    %c1_29 = arith.constant 1 : index
    %c0_30 = arith.constant 0 : index
    %c0_31 = arith.constant 0 : index
    %48 = vector.load %arg0[%c1_29, %c0_30, %c0_31] : memref<2x4x256xf32, #tpu.memory_space<vmem>>, vector<1x4x256xf32>
    %49 = vector.shape_cast %48 : vector<1x4x256xf32> to vector<4x256xf32>
    %cst_32 = arith.constant dense<0.000000e+00> : vector<8x256xf32>
    %50 = tpu.matmul %39, %49, %cst_32 {dimension_numbers = #tpu.dot_dimension_numbers<[1], [0], [0], [1], [0, 0, 1, 1], [], []>} : vector<8x4xf32>, vector<4x256xf32>, vector<8x256xf32> -> vector<8x256xf32>
    %51 = vector.broadcast %37 : vector<8x1xf32> to vector<8x256xf32>
    %52 = arith.addf %50, %51 : vector<8x256xf32>
    %c1_33 = arith.constant 1 : index
    %c0_34 = arith.constant 0 : index
    %c0_35 = arith.constant 0 : index
    %53 = vector.load %arg4[%c1_33, %c0_34, %c0_35] : memref<2x8x256xf32, #tpu.memory_space<vmem>>, vector<1x8x256xf32>
    %54 = vector.shape_cast %53 : vector<1x8x256xf32> to vector<8x256xf32>
    %55 = vector.shape_cast %52 : vector<8x256xf32> to vector<1x8x256xf32>
    tpu.vector_store %arg4[%c1_33, %c0_34, %c0_35], %55 {strides = array<i32>} : memref<2x8x256xf32, #tpu.memory_space<vmem>>, vector<1x8x256xf32>,
    return
  }
}

</mosaic_0001>

<llo_original>
// kernel: tpu_custom_call.1
$region0: #{tpu_custom_call.1}
  #allocation0 [shape = 'u32[]', space=smem, size = 0x4, offset = 0x4, fixed_abs, tag = 'smem constant byte address 0x4 - core index']
  #allocation1 [shape = 'u32[144,128]{1,0:T(1,128)}', space=vmem, size = 0x12000, scoped, tag = 'internal scratch']
  %s0 = inlined_call_operand.vmem [shape: f32[2,4,256], index: 0, kind: input, shape index: {}]
  %s1 = inlined_call_operand.vmem [shape: f32[8,4], index: 1, kind: input, shape index: {}]
  %s2 = inlined_call_operand.vmem [shape: f32[8,1], index: 2, kind: input, shape index: {}]
  %s3 = inlined_call_operand.vmem [shape: f32[8,1], index: 3, kind: input, shape index: {}]
  %s4 = inlined_call_operand.hbm [shape: f32[2,8,256], index: 4, kind: output, shape index: {}]
  %s5 = sld [smem:[#allocation0]]
  $region26: #{tpu_custom_call.1} parent=0
    _
  %s7 = ssub.s32 1, %s5
  %s8 = scalar_select 0, %s7, %s5
  $region1: #{tpu_custom_call.1} parent=0
    #allocation2 [shape = 'u8[16384]{0}', space=vmem, size = 0x4000, scoped, tag = 'output window, operand 0, single buffered']
    #allocation3 [shape = 's32[1]{0}', space=sflag, size = 0x4, scoped, tag = 'scoped memory for tpu_custom_call.1']
    %9 = vsyncpa [#allocation3], 0
    // Predicated region
    $region2: #{tpu_custom_call.1} parent=1 // pred_check
      _
    $region3: #{tpu_custom_call.1} parent=1 // pred_check_branch
      %11 = sbr.rel (0) target = $region5
    $region4: #{tpu_custom_call.1} parent=1 // pred_region
      _
    $region5: #{tpu_custom_call.1} parent=1 // pred_fallthru
      _
    // Predicated region
    $region6: #{tpu_custom_call.1} parent=1 // pred_check
      _
    $region7: #{tpu_custom_call.1} parent=1 // pred_check_branch
      %13 = sbr.rel (0) target = $region9
    $region8: #{tpu_custom_call.1} parent=1 // pred_region
      _
    $region9: #{tpu_custom_call.1} parent=1 // pred_fallthru
      _
    // Predicated region
    $region10: #{tpu_custom_call.1} parent=1 // pred_check
      _
    $region11: #{tpu_custom_call.1} parent=1 // pred_check_branch
      %15 = sbr.rel (0) target = $region13
    $region12: #{tpu_custom_call.1} parent=1 // pred_region
      _
    $region13: #{tpu_custom_call.1} parent=1 // pred_fallthru
      _
    // Predicated region
    $region14: #{tpu_custom_call.1} parent=1 // pred_check
      _
    $region15: #{tpu_custom_call.1} parent=1 // pred_check_branch
      %17 = sbr.rel (0) target = $region17
    $region16: #{tpu_custom_call.1} parent=1 // pred_region
      _
    $region17: #{tpu_custom_call.1} parent=1 // pred_fallthru
      _
    %v18 = vld [vmem:[%s0] sm:$0xff]
    %v20 = vcombine.high %v18, %v18
    %vm22 = vcmask 1043456
    %v23 = vsel %vm22, %v18, 0.0
    %v24 = vsel %vm22, %v20, 0.0
    %v25 = vadd.f32 %v23, %v24
    %26 = vadd.xlane.f32.xlu0 %v25
    %v27 = vpop.xlane.xlu0 %26
    %v28 = vadd.f32 %v27, 0.0
    %s29 = scalar_lea.vmem %s0, 8
    %v30 = vld [vmem:[%s29] sm:$0xff]
    %v32 = vcombine.high %v30, %v30
    %v34 = vsel %vm22, %v30, 0.0
    %v35 = vsel %vm22, %v32, 0.0
    %v36 = vadd.f32 %v34, %v35
    %37 = vadd.xlane.f32.xlu0 %v36
    %v38 = vpop.xlane.xlu0 %37
    %v39 = vadd.f32 %v28, %v38
    %40 = vmatprep.subr.mxu0 %v32
    %41 = vmatpush1.xpose.msra.mxu0 %v30
    %42 = vmatprep.subr.mxu0 0.0
    %43 = vmatpush1.xpose.msra.mxu0 0.0
    %44 = vmatprep.subr.mxu0 0.0
    %45 = vmatpush1.xpose.msra.mxu0 0.0
    %46 = vmatprep.subr.mxu0 0.0
    %47 = vmatpush1.xpose.msra.mxu0 0.0
    %48 = vmatprep.subr.mxu0 0.0
    %49 = vmatpush1.xpose.msra.mxu0 0.0
    %50 = vmatprep.subr.mxu0 0.0
    %51 = vmatpush1.xpose.msra.mxu0 0.0
    %52 = vmatprep.subr.mxu0 0.0
    %53 = vmatpush1.xpose.msra.mxu0 0.0
    %54 = vmatprep.subr.mxu0 0.0
    %55 = vmatpush1.xpose.msra.mxu0 0.0
    %56 = vmatprep.subr.mxu0 0.0
    %57 = vmatpush1.xpose.msra.mxu0 0.0
    %58 = vmatprep.subr.mxu0 0.0
    %59 = vmatpush1.xpose.msra.mxu0 0.0
    %60 = vmatprep.subr.mxu0 0.0
    %61 = vmatpush1.xpose.msra.mxu0 0.0
    %62 = vmatprep.subr.mxu0 0.0
    %63 = vmatpush1.xpose.msra.mxu0 0.0
    %64 = vmatprep.subr.mxu0 0.0
    %65 = vmatpush1.xpose.msra.mxu0 0.0
    %66 = vmatprep.subr.mxu0 0.0
    %67 = vmatpush1.xpose.msra.mxu0 0.0
    %68 = vmatprep.subr.mxu0 0.0
    %69 = vmatpush1.xpose.msra.mxu0 0.0
    %70 = vmatprep.subr.mxu0 0.0
    %71 = vmatpush1.xpose.msra.mxu0 0.0
    %72 = vmatprep.subr.mxu0 0.0
    %73 = vmatpush1.xpose.msra.mxu0 0.0
    %74 = vmatprep.subr.mxu0 0.0
    %75 = vmatpush1.xpose.msra.mxu0 0.0
    %76 = vmatprep.subr.mxu0 0.0
    %77 = vmatpush1.xpose.msra.mxu0 0.0
    %78 = vmatprep.subr.mxu0 0.0
    %79 = vmatpush1.xpose.msra.mxu0 0.0
    %80 = vmatprep.subr.mxu0 0.0
    %81 = vmatpush1.xpose.msra.mxu0 0.0
    %82 = vmatprep.subr.mxu0 0.0
    %83 = vmatpush1.xpose.msra.mxu0 0.0
    %84 = vmatprep.subr.mxu0 0.0
    %85 = vmatpush1.xpose.msra.mxu0 0.0
    %86 = vmatprep.subr.mxu0 0.0
    %87 = vmatpush1.xpose.msra.mxu0 0.0
    %88 = vmatprep.subr.mxu0 0.0
    %89 = vmatpush1.xpose.msra.mxu0 0.0
    %90 = vmatprep.subr.mxu0 0.0
    %91 = vmatpush1.xpose.msra.mxu0 0.0
    %92 = vmatprep.subr.mxu0 0.0
    %93 = vmatpush1.xpose.msra.mxu0 0.0
    %94 = vmatprep.subr.mxu0 0.0
    %95 = vmatpush1.xpose.msra.mxu0 0.0
    %96 = vmatprep.subr.mxu0 0.0
    %97 = vmatpush1.xpose.msra.mxu0 0.0
    %98 = vmatprep.subr.mxu0 0.0
    %99 = vmatpush1.xpose.msra.mxu0 0.0
    %100 = vmatprep.subr.mxu0 0.0
    %101 = vmatpush1.xpose.msra.mxu0 0.0
    %102 = vmatprep.subr.mxu0 0.0
    %103 = vmatpush1.xpose.msra.mxu0 0.0
    %104 = vmatprep.mubr.f32.mxu0 %v32
    %105 = vmatmul.mubr.f32.gmra.mrb[0].mxu0 %v30
    %v106 = vpop.f32.mrb[0].mxu0
    %v107 = vadd.f32 0.0, %v106
    %v108 = vpop.f32.mrb[0].mxu0
    %109 = vdwg.mxu0
    %110 = vmatprep.subr.mxu0 %v20
    %111 = vmatpush1.xpose.msra.mxu0 %v18
    %112 = vmatprep.subr.mxu0 0.0
    %113 = vmatpush1.xpose.msra.mxu0 0.0
    %114 = vmatprep.subr.mxu0 0.0
    %115 = vmatpush1.xpose.msra.mxu0 0.0
    %116 = vmatprep.subr.mxu0 0.0
    %117 = vmatpush1.xpose.msra.mxu0 0.0
    %118 = vmatprep.subr.mxu0 0.0
    %119 = vmatpush1.xpose.msra.mxu0 0.0
    %120 = vmatprep.subr.mxu0 0.0
    %121 = vmatpush1.xpose.msra.mxu0 0.0
    %122 = vmatprep.subr.mxu0 0.0
    %123 = vmatpush1.xpose.msra.mxu0 0.0
    %124 = vmatprep.subr.mxu0 0.0
    %125 = vmatpush1.xpose.msra.mxu0 0.0
    %126 = vmatprep.subr.mxu0 0.0
    %127 = vmatpush1.xpose.msra.mxu0 0.0
    %128 = vmatprep.subr.mxu0 0.0
    %129 = vmatpush1.xpose.msra.mxu0 0.0
    %130 = vmatprep.subr.mxu0 0.0
    %131 = vmatpush1.xpose.msra.mxu0 0.0
    %132 = vmatprep.subr.mxu0 0.0
    %133 = vmatpush1.xpose.msra.mxu0 0.0
    %134 = vmatprep.subr.mxu0 0.0
    %135 = vmatpush1.xpose.msra.mxu0 0.0
    %136 = vmatprep.subr.mxu0 0.0
    %137 = vmatpush1.xpose.msra.mxu0 0.0
    %138 = vmatprep.subr.mxu0 0.0
    %139 = vmatpush1.xpose.msra.mxu0 0.0
    %140 = vmatprep.subr.mxu0 0.0
    %141 = vmatpush1.xpose.msra.mxu0 0.0
    %142 = vmatprep.subr.mxu0 0.0
    %143 = vmatpush1.xpose.msra.mxu0 0.0
    %144 = vmatprep.subr.mxu0 0.0
    %145 = vmatpush1.xpose.msra.mxu0 0.0
    %146 = vmatprep.subr.mxu0 0.0
    %147 = vmatpush1.xpose.msra.mxu0 0.0
    %148 = vmatprep.subr.mxu0 0.0
    %149 = vmatpush1.xpose.msra.mxu0 0.0
    %150 = vmatprep.subr.mxu0 0.0
    %151 = vmatpush1.xpose.msra.mxu0 0.0
    %152 = vmatprep.subr.mxu0 0.0
    %153 = vmatpush1.xpose.msra.mxu0 0.0
    %154 = vmatprep.subr.mxu0 0.0
    %155 = vmatpush1.xpose.msra.mxu0 0.0
    %156 = vmatprep.subr.mxu0 0.0
    %157 = vmatpush1.xpose.msra.mxu0 0.0
    %158 = vmatprep.subr.mxu0 0.0
    %159 = vmatpush1.xpose.msra.mxu0 0.0
    %160 = vmatprep.subr.mxu0 0.0
    %161 = vmatpush1.xpose.msra.mxu0 0.0
    %162 = vmatprep.subr.mxu0 0.0
    %163 = vmatpush1.xpose.msra.mxu0 0.0
    %164 = vmatprep.subr.mxu0 0.0
    %165 = vmatpush1.xpose.msra.mxu0 0.0
    %166 = vmatprep.subr.mxu0 0.0
    %167 = vmatpush1.xpose.msra.mxu0 0.0
    %168 = vmatprep.subr.mxu0 0.0
    %169 = vmatpush1.xpose.msra.mxu0 0.0
    %170 = vmatprep.subr.mxu0 0.0
    %171 = vmatpush1.xpose.msra.mxu0 0.0
    %172 = vmatprep.subr.mxu0 0.0
    %173 = vmatpush1.xpose.msra.mxu0 0.0
    %174 = vmatprep.mubr.f32.mxu0 %v20
    %175 = vmatmul.mubr.f32.gmra.mrb[0].mxu0 %v18
    %v176 = vpop.f32.mrb[0].mxu0
    %v177 = vadd.f32 %v107, %v176
    %v178 = vpop.f32.mrb[0].mxu0
    %179 = vdwg.mxu0
    %v180 = vld [vmem:[%s1] sm:$0xff]
    %vm181 = vcmask 31744
    %v183 = vsel %vm181, %v180, 0
    %v186 = vsel %vm22, %v39, 0
    %188 = vmatprep.subr.mxu0 0.0
    %189 = vmatpush1.msra.mxu0 %v186
    %190 = vmatprep.subr.mxu0 0.0
    %191 = vmatpush1.msra.mxu0 0.0
    %192 = vmatprep.subr.mxu0 0.0
    %193 = vmatpush1.msra.mxu0 0.0
    %194 = vmatprep.subr.mxu0 0.0
    %195 = vmatpush1.msra.mxu0 0.0
    %196 = vmatprep.subr.mxu0 0.0
    %197 = vmatpush1.msra.mxu0 0.0
    %198 = vmatprep.subr.mxu0 0.0
    %199 = vmatpush1.msra.mxu0 0.0
    %200 = vmatprep.subr.mxu0 0.0
    %201 = vmatpush1.msra.mxu0 0.0
    %202 = vmatprep.subr.mxu0 0.0
    %203 = vmatpush1.msra.mxu0 0.0
    %204 = vmatprep.subr.mxu0 0.0
    %205 = vmatpush1.msra.mxu0 0.0
    %206 = vmatprep.subr.mxu0 0.0
    %207 = vmatpush1.msra.mxu0 0.0
    %208 = vmatprep.subr.mxu0 0.0
    %209 = vmatpush1.msra.mxu0 0.0
    %210 = vmatprep.subr.mxu0 0.0
    %211 = vmatpush1.msra.mxu0 0.0
    %212 = vmatprep.subr.mxu0 0.0
    %213 = vmatpush1.msra.mxu0 0.0
    %214 = vmatprep.subr.mxu0 0.0
    %215 = vmatpush1.msra.mxu0 0.0
    %216 = vmatprep.subr.mxu0 0.0
    %217 = vmatpush1.msra.mxu0 0.0
    %218 = vmatprep.subr.mxu0 0.0
    %219 = vmatpush1.msra.mxu0 0.0
    %220 = vmatprep.subr.mxu0 0.0
    %221 = vmatpush1.msra.mxu0 0.0
    %222 = vmatprep.subr.mxu0 0.0
    %223 = vmatpush1.msra.mxu0 0.0
    %224 = vmatprep.subr.mxu0 0.0
    %225 = vmatpush1.msra.mxu0 0.0
    %226 = vmatprep.subr.mxu0 0.0
    %227 = vmatpush1.msra.mxu0 0.0
    %228 = vmatprep.subr.mxu0 0.0
    %229 = vmatpush1.msra.mxu0 0.0
    %230 = vmatprep.subr.mxu0 0.0
    %231 = vmatpush1.msra.mxu0 0.0
    %232 = vmatprep.subr.mxu0 0.0
    %233 = vmatpush1.msra.mxu0 0.0
    %234 = vmatprep.subr.mxu0 0.0
    %235 = vmatpush1.msra.mxu0 0.0
    %236 = vmatprep.subr.mxu0 0.0
    %237 = vmatpush1.msra.mxu0 0.0
    %238 = vmatprep.subr.mxu0 0.0
    %239 = vmatpush1.msra.mxu0 0.0
    %240 = vmatprep.subr.mxu0 0.0
    %241 = vmatpush1.msra.mxu0 0.0
    %242 = vmatprep.subr.mxu0 0.0
    %243 = vmatpush1.msra.mxu0 0.0
    %244 = vmatprep.subr.mxu0 0.0
    %245 = vmatpush1.msra.mxu0 0.0
    %246 = vmatprep.subr.mxu0 0.0
    %247 = vmatpush1.msra.mxu0 0.0
    %248 = vmatprep.subr.mxu0 0.0
    %249 = vmatpush1.msra.mxu0 0.0
    %250 = vmatprep.subr.mxu0 0.0
    %251 = vmatpush1.msra.mxu0 0.0
    %252 = vmatprep.mubr.f32.mxu0 0.0
    %253 = vmatmul.mubr.f32.gmra.mrb[0].mxu0 %v183
    %v254 = vpop.f32.mrb[0].mxu0
    %v255 = vadd.f32 0.0, %v254
    %v256 = vpop.f32.mrb[0].mxu0
    %257 = vdwg.mxu0
    %v259 = vsel %vm22, %v177, 0
    %261 = vmatprep.subr.mxu0 0.0
    %262 = vmatpush1.msra.mxu0 %v259
    %263 = vmatprep.subr.mxu0 0.0
    %264 = vmatpush1.msra.mxu0 0.0
    %265 = vmatprep.subr.mxu0 0.0
    %266 = vmatpush1.msra.mxu0 0.0
    %267 = vmatprep.subr.mxu0 0.0
    %268 = vmatpush1.msra.mxu0 0.0
    %269 = vmatprep.subr.mxu0 0.0
    %270 = vmatpush1.msra.mxu0 0.0
    %271 = vmatprep.subr.mxu0 0.0
    %272 = vmatpush1.msra.mxu0 0.0
    %273 = vmatprep.subr.mxu0 0.0
    %274 = vmatpush1.msra.mxu0 0.0
    %275 = vmatprep.subr.mxu0 0.0
    %276 = vmatpush1.msra.mxu0 0.0
    %277 = vmatprep.subr.mxu0 0.0
    %278 = vmatpush1.msra.mxu0 0.0
    %279 = vmatprep.subr.mxu0 0.0
    %280 = vmatpush1.msra.mxu0 0.0
    %281 = vmatprep.subr.mxu0 0.0
    %282 = vmatpush1.msra.mxu0 0.0
    %283 = vmatprep.subr.mxu0 0.0
    %284 = vmatpush1.msra.mxu0 0.0
    %285 = vmatprep.subr.mxu0 0.0
    %286 = vmatpush1.msra.mxu0 0.0
    %287 = vmatprep.subr.mxu0 0.0
    %288 = vmatpush1.msra.mxu0 0.0
    %289 = vmatprep.subr.mxu0 0.0
    %290 = vmatpush1.msra.mxu0 0.0
    %291 = vmatprep.subr.mxu0 0.0
    %292 = vmatpush1.msra.mxu0 0.0
    %293 = vmatprep.subr.mxu0 0.0
    %294 = vmatpush1.msra.mxu0 0.0
    %295 = vmatprep.subr.mxu0 0.0
    %296 = vmatpush1.msra.mxu0 0.0
    %297 = vmatprep.subr.mxu0 0.0
    %298 = vmatpush1.msra.mxu0 0.0
    %299 = vmatprep.subr.mxu0 0.0
    %300 = vmatpush1.msra.mxu0 0.0
    %301 = vmatprep.subr.mxu0 0.0
    %302 = vmatpush1.msra.mxu0 0.0
    %303 = vmatprep.subr.mxu0 0.0
    %304 = vmatpush1.msra.mxu0 0.0
    %305 = vmatprep.subr.mxu0 0.0
    %306 = vmatpush1.msra.mxu0 0.0
    %307 = vmatprep.subr.mxu0 0.0
    %308 = vmatpush1.msra.mxu0 0.0
    %309 = vmatprep.subr.mxu0 0.0
    %310 = vmatpush1.msra.mxu0 0.0
    %311 = vmatprep.subr.mxu0 0.0
    %312 = vmatpush1.msra.mxu0 0.0
    %313 = vmatprep.subr.mxu0 0.0
    %314 = vmatpush1.msra.mxu0 0.0
    %315 = vmatprep.subr.mxu0 0.0
    %316 = vmatpush1.msra.mxu0 0.0
    %317 = vmatprep.subr.mxu0 0.0
    %318 = vmatpush1.msra.mxu0 0.0
    %319 = vmatprep.subr.mxu0 0.0
    %320 = vmatpush1.msra.mxu0 0.0
    %321 = vmatprep.subr.mxu0 0.0
    %322 = vmatpush1.msra.mxu0 0.0
    %323 = vmatprep.subr.mxu0 0.0
    %324 = vmatpush1.msra.mxu0 0.0
    %325 = vmatprep.mubr.f32.mxu0 0.0
    %326 = vmatmul.mubr.f32.gmra.mrb[0].mxu0 %v183
    %v327 = vpop.f32.mrb[0].mxu0
    %v328 = vadd.f32 0.0, %v327
    %v329 = vpop.f32.mrb[0].mxu0
    %330 = vdwg.mxu0
    %v331 = vmul.f32 %v328, %v180
    %v332 = vsel %vm181, %v331, 0.0
    %333 = vadd.xlane.f32.xlu0 %v332
    %v334 = vpop.xlane.xlu0 %333
    %v335 = vrcp.pop 512.0
    %v336 = vmul.f32 %v255, %v335
    %v337 = vmul.f32 %v334, %v335
    %v338 = vmul.f32 %v336, %v336
    %v339 = vsub.f32 %v337, %v338
    %v340 = vmax.f32 %v339, 0.0
    %v341 = vadd.f32 %v340, 1e-05
    %v342 = vrsqrt.pop %v341
    %v343 = vld [vmem:[%s2] sm:$0xff]
    %v344 = vmul.f32 %v342, %v343
    %v345 = vld [vmem:[%s3] sm:$0xff]
    %v346 = vmul.f32 %v336, %v344
    %v347 = vsub.f32 %v345, %v346
    %349 = vset.pattern.permute.xlu0 0
    %350 = vperm.xlu0 %349, %v344
    %v351 = vpop.permute.xlu0 %350
    %v353 = vmul.f32 %v180, %v351
    %355 = vset.pattern.permute.xlu0 0
    %356 = vperm.xlu0 %355, %v347
    %v357 = vpop.permute.xlu0 %356
    %v360 = vsel %vm181, %v353, 0
    %v362 = vsel %vm22, %v18, 0
    %v364 = vsel %vm22, %v20, 0
    %366 = vmatprep.subr.mxu0 %v364
    %367 = vmatpush1.msra.mxu0 %v362
    %368 = vmatprep.subr.mxu0 0.0
    %369 = vmatpush1.msra.mxu0 0.0
    %370 = vmatprep.subr.mxu0 0.0
    %371 = vmatpush1.msra.mxu0 0.0
    %372 = vmatprep.subr.mxu0 0.0
    %373 = vmatpush1.msra.mxu0 0.0
    %374 = vmatprep.subr.mxu0 0.0
    %375 = vmatpush1.msra.mxu0 0.0
    %376 = vmatprep.subr.mxu0 0.0
    %377 = vmatpush1.msra.mxu0 0.0
    %378 = vmatprep.subr.mxu0 0.0
    %379 = vmatpush1.msra.mxu0 0.0
    %380 = vmatprep.subr.mxu0 0.0
    %381 = vmatpush1.msra.mxu0 0.0
    %382 = vmatprep.subr.mxu0 0.0
    %383 = vmatpush1.msra.mxu0 0.0
    %384 = vmatprep.subr.mxu0 0.0
    %385 = vmatpush1.msra.mxu0 0.0
    %386 = vmatprep.subr.mxu0 0.0
    %387 = vmatpush1.msra.mxu0 0.0
    %388 = vmatprep.subr.mxu0 0.0
    %389 = vmatpush1.msra.mxu0 0.0
    %390 = vmatprep.subr.mxu0 0.0
    %391 = vmatpush1.msra.mxu0 0.0
    %392 = vmatprep.subr.mxu0 0.0
    %393 = vmatpush1.msra.mxu0 0.0
    %394 = vmatprep.subr.mxu0 0.0
    %395 = vmatpush1.msra.mxu0 0.0
    %396 = vmatprep.subr.mxu0 0.0
    %397 = vmatpush1.msra.mxu0 0.0
    %398 = vmatprep.subr.mxu0 0.0
    %399 = vmatpush1.msra.mxu0 0.0
    %400 = vmatprep.subr.mxu0 0.0
    %401 = vmatpush1.msra.mxu0 0.0
    %402 = vmatprep.subr.mxu0 0.0
    %403 = vmatpush1.msra.mxu0 0.0
    %404 = vmatprep.subr.mxu0 0.0
    %405 = vmatpush1.msra.mxu0 0.0
    %406 = vmatprep.subr.mxu0 0.0
    %407 = vmatpush1.msra.mxu0 0.0
    %408 = vmatprep.subr.mxu0 0.0
    %409 = vmatpush1.msra.mxu0 0.0
    %410 = vmatprep.subr.mxu0 0.0
    %411 = vmatpush1.msra.mxu0 0.0
    %412 = vmatprep.subr.mxu0 0.0
    %413 = vmatpush1.msra.mxu0 0.0
    %414 = vmatprep.subr.mxu0 0.0
    %415 = vmatpush1.msra.mxu0 0.0
    %416 = vmatprep.subr.mxu0 0.0
    %417 = vmatpush1.msra.mxu0 0.0
    %418 = vmatprep.subr.mxu0 0.0
    %419 = vmatpush1.msra.mxu0 0.0
    %420 = vmatprep.subr.mxu0 0.0
    %421 = vmatpush1.msra.mxu0 0.0
    %422 = vmatprep.subr.mxu0 0.0
    %423 = vmatpush1.msra.mxu0 0.0
    %424 = vmatprep.subr.mxu0 0.0
    %425 = vmatpush1.msra.mxu0 0.0
    %426 = vmatprep.subr.mxu0 0.0
    %427 = vmatpush1.msra.mxu0 0.0
    %428 = vmatprep.subr.mxu0 0.0
    %429 = vmatpush1.msra.mxu0 0.0
    %430 = vmatprep.mubr.f32.mxu0 0.0
    %431 = vmatmul.mubr.f32.gmra.mrb[0].mxu0 %v360
    %v432 = vpop.f32.mrb[0].mxu0
    %v433 = vadd.f32 %v357, %v432
    %v434 = vpop.f32.mrb[0].mxu0
    %v435 = vadd.f32 %v357, %v434
    %436 = vdwg.mxu0
    %437 = vst [vmem:[#allocation2] sm:$0xff] %v433
    %438 = vst [vmem:[#allocation2 + $0x8] sm:$0xff] %v435
    %v439 = vld [vmem:[%s29] sm:$0xff]
    %v441 = vcombine.high %v439, %v439
    %v442 = vsel %vm22, %v439, 0
    %v444 = vsel %vm22, %v441, 0
    %446 = vmatprep.subr.mxu0 %v444
    %447 = vmatpush1.msra.mxu0 %v442
    %448 = vmatprep.subr.mxu0 0.0
    %449 = vmatpush1.msra.mxu0 0.0
    %450 = vmatprep.subr.mxu0 0.0
    %451 = vmatpush1.msra.mxu0 0.0
    %452 = vmatprep.subr.mxu0 0.0
    %453 = vmatpush1.msra.mxu0 0.0
    %454 = vmatprep.subr.mxu0 0.0
    %455 = vmatpush1.msra.mxu0 0.0
    %456 = vmatprep.subr.mxu0 0.0
    %457 = vmatpush1.msra.mxu0 0.0
    %458 = vmatprep.subr.mxu0 0.0
    %459 = vmatpush1.msra.mxu0 0.0
    %460 = vmatprep.subr.mxu0 0.0
    %461 = vmatpush1.msra.mxu0 0.0
    %462 = vmatprep.subr.mxu0 0.0
    %463 = vmatpush1.msra.mxu0 0.0
    %464 = vmatprep.subr.mxu0 0.0
    %465 = vmatpush1.msra.mxu0 0.0
    %466 = vmatprep.subr.mxu0 0.0
    %467 = vmatpush1.msra.mxu0 0.0
    %468 = vmatprep.subr.mxu0 0.0
    %469 = vmatpush1.msra.mxu0 0.0
    %470 = vmatprep.subr.mxu0 0.0
    %471 = vmatpush1.msra.mxu0 0.0
    %472 = vmatprep.subr.mxu0 0.0
    %473 = vmatpush1.msra.mxu0 0.0
    %474 = vmatprep.subr.mxu0 0.0
    %475 = vmatpush1.msra.mxu0 0.0
    %476 = vmatprep.subr.mxu0 0.0
    %477 = vmatpush1.msra.mxu0 0.0
    %478 = vmatprep.subr.mxu0 0.0
    %479 = vmatpush1.msra.mxu0 0.0
    %480 = vmatprep.subr.mxu0 0.0
    %481 = vmatpush1.msra.mxu0 0.0
    %482 = vmatprep.subr.mxu0 0.0
    %483 = vmatpush1.msra.mxu0 0.0
    %484 = vmatprep.subr.mxu0 0.0
    %485 = vmatpush1.msra.mxu0 0.0
    %486 = vmatprep.subr.mxu0 0.0
    %487 = vmatpush1.msra.mxu0 0.0
    %488 = vmatprep.subr.mxu0 0.0
    %489 = vmatpush1.msra.mxu0 0.0
    %490 = vmatprep.subr.mxu0 0.0
    %491 = vmatpush1.msra.mxu0 0.0
    %492 = vmatprep.subr.mxu0 0.0
    %493 = vmatpush1.msra.mxu0 0.0
    %494 = vmatprep.subr.mxu0 0.0
    %495 = vmatpush1.msra.mxu0 0.0
    %496 = vmatprep.subr.mxu0 0.0
    %497 = vmatpush1.msra.mxu0 0.0
    %498 = vmatprep.subr.mxu0 0.0
    %499 = vmatpush1.msra.mxu0 0.0
    %500 = vmatprep.subr.mxu0 0.0
    %501 = vmatpush1.msra.mxu0 0.0
    %502 = vmatprep.subr.mxu0 0.0
    %503 = vmatpush1.msra.mxu0 0.0
    %504 = vmatprep.subr.mxu0 0.0
    %505 = vmatpush1.msra.mxu0 0.0
    %506 = vmatprep.subr.mxu0 0.0
    %507 = vmatpush1.msra.mxu0 0.0
    %508 = vmatprep.subr.mxu0 0.0
    %509 = vmatpush1.msra.mxu0 0.0
    %510 = vmatprep.mubr.f32.mxu0 0.0
    %511 = vmatmul.mubr.f32.gmra.mrb[0].mxu0 %v360
    %v512 = vpop.f32.mrb[0].mxu0
    %v513 = vadd.f32 %v357, %v512
    %v514 = vpop.f32.mrb[0].mxu0
    %v515 = vadd.f32 %v357, %v514
    %516 = vdwg.mxu0
    %s517 = scalar_lea.vmem [#allocation2], 16
    %518 = vst [vmem:[%s517] sm:$0xff] %v513
    %519 = vst [vmem:[%s517 + $0x8] sm:$0xff] %v515
    // Predicated region
    $region18: #{tpu_custom_call.1} parent=1 // pred_check
      _
    $region19: #{tpu_custom_call.1} parent=1 // pred_check_branch
      %521 = sbr.rel (0) target = $region21
    $region20: #{tpu_custom_call.1} parent=1 // pred_region
      %s523 = ssub.s32 512, 512
      %524 = vsyncadd [#allocation3], %s523
      %s525 = sshll.u32 [#allocation2], 4
      %s526 = int_to_ptr.vmem [resolvable:$true] %s525
      %531 = dma.vmem_to_hbm [thread:$0]  %s526, 512, %s4, [#allocation3], 256, 256, 16
    $region21: #{tpu_custom_call.1} parent=1 // pred_fallthru
      _
    // Predicated region
    $region22: #{tpu_custom_call.1} parent=1 // pred_check
      _
    $region23: #{tpu_custom_call.1} parent=1 // pred_check_branch
      %533 = sbr.rel (0) target = $region25
    $region24: #{tpu_custom_call.1} parent=1 // pred_region
      %534 = dma.done [#allocation3], 512
    $region25: #{tpu_custom_call.1} parent=1 // pred_fallthru
      _
    %535 = vsyncpa [#allocation3], 1

</llo_original>
